<compile_context>
chip_gen: v6e
topology: v6e:2x2x1
jax: 0.10.0
libtpu: 0.0.40
codegen_flags: <defaults>
</compile_context>

<pallas_src>
import jax
import jax.numpy as jnp
from jax.experimental import pallas as pl
from jax.experimental.pallas import tpu as pltpu


def _diag_scale_kernel(x_ref, w_ref, o_ref):
    # x_ref: (tm, tn) tile; w_ref: (1, tn) row broadcast over sublanes;
    # o_ref: (tm, tn) tile.
    o_ref[...] = (x_ref[...] * w_ref[...]).astype(o_ref.dtype)


def _round_up(a, b):
    return ((a + b - 1) // b) * b


def _choose_blocks(M, N, itemsize):
    """Pick (tm, tn) so each block is ~4 MiB (double-buffered x + out stays
    well under the 32 MiB scoped VMEM limit on every generation, including
    v7x's 64 MiB physical ceiling), lane-dense, and sublane-packing aligned."""
    LANE = 128
    TN_CAP = 2048                       # multiple of 128, keeps stores unmasked
    TARGET_BLOCK_BYTES = 4 * 1024 * 1024

    # Lane (feature) block: full N when small or non-128-aligned (block ==
    # full dim is always legal); otherwise a large multiple of 128.
    if N <= TN_CAP or N % LANE != 0:
        tn = N
    else:
        tn = TN_CAP

    # Sublane packing granularity: 8 for f32, 16 for bf16, 32 for int8/fp8.
    packing = max(8, 32 // max(1, itemsize))

    tm = max(packing, TARGET_BLOCK_BYTES // max(1, tn * itemsize))
    tm = (tm // packing) * packing      # multiple of the packing granularity
    if M <= tm:
        tm = M                          # block == full dim: always legal
    return tm, tn


def attentive_forward(x, w):
    """Compute x @ diag(w) with a Pallas TPU kernel.

    x: array of shape (..., isize)
    w: array of shape (isize,)
    """
    isize = w.shape[0]
    assert x.shape[-1] == isize
    orig_shape = x.shape

    x2d = x.reshape(-1, isize)
    M, N = x2d.shape
    w2d = w.astype(x.dtype).reshape(1, N)

    tm, tn = _choose_blocks(M, N, jnp.dtype(x.dtype).itemsize)
    grid = (pl.cdiv(M, tm), pl.cdiv(N, tn))

    out = pl.pallas_call(
        _diag_scale_kernel,
        out_shape=jax.ShapeDtypeStruct((M, N), x.dtype),
        grid_spec=pltpu.PrefetchScalarGridSpec(
            num_scalar_prefetch=0,
            grid=grid,
            in_specs=[
                pl.BlockSpec((tm, tn), lambda i, j: (i, j)),
                # w: constant row index -> not re-DMA'd across the row axis.
                pl.BlockSpec((1, tn), lambda i, j: (0, j)),
            ],
            out_specs=pl.BlockSpec((tm, tn), lambda i, j: (i, j)),
        ),
        compiler_params=pltpu.CompilerParams(
            # Both axes independent -> shard across the 2 TCs on v7x.
            dimension_semantics=("parallel", "parallel"),
            # Raise v5e's 16 MiB scoped default; 32 MiB is safe on every
            # generation (v7x physical VMEM is 64 MiB) and covers the
            # ~16 MiB double-buffered working set of the 4 MiB blocks.
            vmem_limit_bytes=32 * 1024 * 1024,
        ),
    )(x2d, w2d)

    return out.reshape(orig_shape)


if __name__ == "__main__":
    key = jax.random.PRNGKey(0)
    isize = 128
    # x: (batch=2, seq=8, isize=128)
    x = jax.random.normal(key, (2, 8, isize), dtype=jnp.float32)

    # Parameter init exactly as the module's __init__: w = ones(isize).
    w = jnp.ones((isize,), dtype=jnp.float32)
    y = attentive_forward(x, w)
    y = jax.block_until_ready(y)
    y_ref = x @ jnp.diag(w)
    assert y.shape == x.shape
    assert jnp.allclose(y, y_ref, atol=1e-6, rtol=1e-6)

    # Extra check with a non-trivial w to exercise the actual scaling math.
    w2 = jax.random.normal(jax.random.PRNGKey(1), (isize,), dtype=jnp.float32)
    y2 = jax.block_until_ready(attentive_forward(x, w2))
    y2_ref = x @ jnp.diag(w2)
    assert jnp.allclose(y2, y2_ref, atol=1e-5, rtol=1e-5)

    print("KERNEL_OK")
</pallas_src>

<mosaic_0001>
module attributes {stable_mosaic.version = 11 : i64} {
  func.func @_diag_scale_kernel(%arg0: i32, %arg1: i32, %arg2: memref<16x128xf32, #tpu.memory_space<vmem>>, %arg3: memref<1x128xf32, #tpu.memory_space<vmem>>, %arg4: memref<16x128xf32, #tpu.memory_space<vmem>>) attributes {dimension_semantics = [#tpu.dimension_semantics<parallel>, #tpu.dimension_semantics<parallel>], iteration_bounds = array<i64: 1, 1>, scalar_prefetch = 0 : i64, scratch_operands = 0 : i64, tpu.core_type = #tpu.core_type<tc>, window_params = [{transform_indices = @transform_0, window_bounds = array<i64: 16, 128>}, {transform_indices = @transform_1, window_bounds = array<i64: 1, 128>}, {transform_indices = @transform_2, window_bounds = array<i64: 16, 128>}]} {
    %c0 = arith.constant 0 : index
    %c0_0 = arith.constant 0 : index
    %0 = vector.load %arg2[%c0, %c0_0] : memref<16x128xf32, #tpu.memory_space<vmem>>, vector<16x128xf32>
    %c0_1 = arith.constant 0 : index
    %c0_2 = arith.constant 0 : index
    %1 = vector.load %arg3[%c0_1, %c0_2] : memref<1x128xf32, #tpu.memory_space<vmem>>, vector<1x128xf32>
    %2 = vector.broadcast %1 : vector<1x128xf32> to vector<16x128xf32>
    %3 = arith.mulf %0, %2 : vector<16x128xf32>
    %c0_3 = arith.constant 0 : index
    %c0_4 = arith.constant 0 : index
    %4 = vector.load %arg4[%c0_3, %c0_4] : memref<16x128xf32, #tpu.memory_space<vmem>>, vector<16x128xf32>
    tpu.vector_store %arg4[%c0_3, %c0_4], %3 {strides = array<i32>} : memref<16x128xf32, #tpu.memory_space<vmem>>, vector<16x128xf32>,
    return
  }
  func.func @transform_0(%arg0: i32, %arg1: i32) -> (i32, i32) {
    %c0_i32 = arith.constant 0 : i32
    return %arg0, %arg1 : i32, i32
  }
  func.func @transform_1(%arg0: i32, %arg1: i32) -> (i32, i32) {
    %c0_i32 = arith.constant 0 : i32
    %c0_i32_0 = arith.constant 0 : i32
    return %c0_i32, %arg1 : i32, i32
  }
  func.func @transform_2(%arg0: i32, %arg1: i32) -> (i32, i32) {
    %c0_i32 = arith.constant 0 : i32
    return %arg0, %arg1 : i32, i32
  }
}

</mosaic_0001>

<llo_original>
// kernel: tpu_custom_call.1
$region0: #{tpu_custom_call.1}
  #allocation0 [shape = 'u32[]', space=smem, size = 0x4, offset = 0x4, fixed_abs, tag = 'smem constant byte address 0x4 - core index']
  #allocation1 [shape = 'u32[144,128]{1,0:T(1,128)}', space=vmem, size = 0x12000, scoped, tag = 'internal scratch']
  %s0 = inlined_call_operand.hbm [shape: f32[16,128], index: 0, kind: input, shape index: {}]
  %s1 = inlined_call_operand.vmem [shape: f32[1,128], index: 1, kind: input, shape index: {}]
  %s2 = inlined_call_operand.hbm [shape: f32[16,128], index: 2, kind: output, shape index: {}]
  %s3 = sld [smem:[#allocation0]]
  $region22: #{tpu_custom_call.1} parent=0
    _
  %s5 = ssub.s32 1, %s3
  %s6 = scalar_select 0, %s5, %s3
  $region1: #{tpu_custom_call.1} parent=0
    #allocation2 [shape = 'u8[8192]{0}', space=vmem, size = 0x2000, scoped, tag = 'input window, operand 0, single buffered']
    #allocation3 [shape = 's32[1]{0}', space=sflag, size = 0x4, scoped, tag = 'scoped memory for tpu_custom_call.1']
    #allocation4 [shape = 's32[1]{0}', space=sflag, size = 0x4, scoped, tag = 'scoped memory for tpu_custom_call.1']
    #allocation5 [shape = 'u8[8192]{0}', space=vmem, size = 0x2000, scoped, tag = 'output window, operand 0, single buffered']
    %7 = vsyncpa [#allocation3], 0
    %8 = vsyncpa [#allocation4], 0
    // Predicated region
    $region2: #{tpu_custom_call.1} parent=1 // pred_check
      _
    $region3: #{tpu_custom_call.1} parent=1 // pred_check_branch
      %10 = sbr.rel (0) target = $region5
    $region4: #{tpu_custom_call.1} parent=1 // pred_region
      %s12 = ssub.s32 256, 256
      %13 = vsyncadd [#allocation3], %s12
      %s14 = sshll.u32 [#allocation2], 4
      %s15 = int_to_ptr.vmem [resolvable:$true] %s14
      %20 = dma.hbm_to_vmem [thread:$0]  %s0, 256, %s15, [#allocation3], 128, 128, 8
    $region5: #{tpu_custom_call.1} parent=1 // pred_fallthru
      _
    // Predicated region
    $region6: #{tpu_custom_call.1} parent=1 // pred_check
      _
    $region7: #{tpu_custom_call.1} parent=1 // pred_check_branch
      %22 = sbr.rel (0) target = $region9
    $region8: #{tpu_custom_call.1} parent=1 // pred_region
      _
    $region9: #{tpu_custom_call.1} parent=1 // pred_fallthru
      _
    // Predicated region
    $region10: #{tpu_custom_call.1} parent=1 // pred_check
      _
    $region11: #{tpu_custom_call.1} parent=1 // pred_check_branch
      %24 = sbr.rel (0) target = $region13
    $region12: #{tpu_custom_call.1} parent=1 // pred_region
      %25 = dma.done [#allocation3], 256
    $region13: #{tpu_custom_call.1} parent=1 // pred_fallthru
      _
    %v26 = vld [vmem:[#allocation2] sm:$0xff]
    %v27 = vld [vmem:[#allocation2 + $0x8] sm:$0xff]
    %v28 = vld [vmem:[%s1] sm:$0x1]
    %v30 = vlaneseq
    %v31 = vshrl.u32 %v30, 7
    %v32 = vsub.s32 0, %v31
    %v33 = vrot.slane %v28, %v32
    %v35 = vmul.f32 %v26, %v33
    %v36 = vmul.f32 %v27, %v33
    %37 = vst [vmem:[#allocation5] sm:$0xff] %v35
    %38 = vst [vmem:[#allocation5 + $0x8] sm:$0xff] %v36
    // Predicated region
    $region14: #{tpu_custom_call.1} parent=1 // pred_check
      _
    $region15: #{tpu_custom_call.1} parent=1 // pred_check_branch
      %40 = sbr.rel (0) target = $region17
    $region16: #{tpu_custom_call.1} parent=1 // pred_region
      %s42 = ssub.s32 256, 256
      %43 = vsyncadd [#allocation4], %s42
      %s44 = sshll.u32 [#allocation5], 4
      %s45 = int_to_ptr.vmem [resolvable:$true] %s44
      %50 = dma.vmem_to_hbm [thread:$0]  %s45, 256, %s2, [#allocation4], 128, 128, 8
    $region17: #{tpu_custom_call.1} parent=1 // pred_fallthru
      _
    // Predicated region
    $region18: #{tpu_custom_call.1} parent=1 // pred_check
      _
    $region19: #{tpu_custom_call.1} parent=1 // pred_check_branch
      %52 = sbr.rel (0) target = $region21
    $region20: #{tpu_custom_call.1} parent=1 // pred_region
      %53 = dma.done [#allocation4], 256
    $region21: #{tpu_custom_call.1} parent=1 // pred_fallthru
      _
    %54 = vsyncpa [#allocation3], 1
    %55 = vsyncpa [#allocation4], 1

</llo_original>
